<compile_context>
chip_gen: v5e
topology: v5e:2x2
jax: 0.10.0
libtpu: 0.0.40
codegen_flags: <defaults>
</compile_context>

<pallas_src>
from functools import partial

import jax
import jax.numpy as jnp
from jax import lax
from jax.experimental import pallas as pl
from jax.experimental.pallas import tpu as pltpu

BN_EPS = 1e-5


# ----------------------------------------------------------------------------
# helpers
# ----------------------------------------------------------------------------
def _cdiv(a, b):
    return -(-a // b)


def _vmem_capacity_bytes():
    """Physical VMEM per TensorCore; conservative fallback = v7x (64 MiB)."""
    try:
        return int(pltpu.get_tpu_info().vmem_capacity_bytes)
    except Exception:
        return 64 * 1024 * 1024


def _mosaic_params(cap, dims=None):
    # Raise the scoped-VMEM limit well above the per-generation defaults
    # (16/32 MiB) but stay under physical capacity on every generation.
    return pltpu.CompilerParams(
        dimension_semantics=dims,
        vmem_limit_bytes=int(cap * 3 // 4),
    )


def _pick_tile(rows, lanes, cap):
    """Lane-tile: large multiple of 128, bounded so double-buffered blocks plus
    in-kernel temporaries stay comfortably inside the scoped VMEM limit."""
    budget = min(8 << 20, cap // 16)                      # bytes per block
    tl = max(128, (budget // (rows * 4)) // 128 * 128)
    tl = min(tl, (lanes // 128) * 128)
    return int(max(tl, 128))


# ----------------------------------------------------------------------------
# fused single-block kernel (slab resident in VMEM): stats + normalize in one
# ----------------------------------------------------------------------------
def _fused_kernel(x_ref, gamma_ref, beta_ref, o_ref, *, num_ch, n, eps):
    x = x_ref[...]                                        # (rows, lanes)
    rows, lanes = x.shape
    lane = lax.broadcasted_iota(jnp.int32, (rows, lanes), 1)
    evn = (lane % 2) == 0                                 # even lanes = real part

    xx = x * x
    s_all = jnp.sum(x, axis=1, keepdims=True)
    s_e = jnp.sum(jnp.where(evn, x, 0.0), axis=1, keepdims=True)
    q_all = jnp.sum(xx, axis=1, keepdims=True)
    q_e = jnp.sum(jnp.where(evn, xx, 0.0), axis=1, keepdims=True)
    stats = jnp.concatenate([s_e, s_all - s_e, q_e, q_all - q_e], axis=1)  # (rows,4)

    # Combine rows that share a channel (row r -> channel r % num_ch) with a tiny
    # one-hot matmul; result is broadcast back per row.
    ri = lax.broadcasted_iota(jnp.int32, (rows, rows), 0) % num_ch
    rj = lax.broadcasted_iota(jnp.int32, (rows, rows), 1) % num_ch
    comb = (ri == rj).astype(jnp.float32)
    cstats = jnp.dot(comb, stats, preferred_element_type=jnp.float32)      # (rows,4)

    inv_n = jnp.float32(1.0 / n)
    mean = cstats[:, 0:2] * inv_n                         # (rows, 2)  [real, imag]
    var = jnp.maximum(cstats[:, 2:4] * inv_n - mean * mean, 0.0)
    scale = gamma_ref[...] * lax.rsqrt(var + eps)         # (rows, 2)
    shift = beta_ref[...] - mean * scale

    sc = jnp.where(evn, scale[:, 0:1], scale[:, 1:2])
    sh = jnp.where(evn, shift[:, 0:1], shift[:, 1:2])
    o_ref[...] = x * sc + sh


def _fused_forward(x2, gamma2, beta2, *, num_ch, n, eps, cap):
    rows, lanes = x2.shape
    return pl.pallas_call(
        partial(_fused_kernel, num_ch=num_ch, n=n, eps=eps),
        out_shape=jax.ShapeDtypeStruct((rows, lanes), jnp.float32),
        compiler_params=_mosaic_params(cap),
    )(x2, gamma2, beta2)


# ----------------------------------------------------------------------------
# streaming two-pass path
# ----------------------------------------------------------------------------
def _stats_kernel(x_ref, out_ref, s_acc, q_acc, *, nt, tl, total_lanes, ragged):
    """Per-row sums / sums-of-squares, parity kept implicitly by accumulating
    into a 128-lane scratch with pure VPU adds (128 is even, so scratch lane
    parity == input lane parity).  Single cross-lane reduce at the last step."""
    i = pl.program_id(1)

    @pl.when(i == 0)
    def _init():
        s_acc[...] = jnp.zeros_like(s_acc)
        q_acc[...] = jnp.zeros_like(q_acc)

    x = x_ref[...]                                        # (rows, tl)
    if ragged:
        tile = pl.program_id(0) * nt + i
        lane = lax.broadcasted_iota(jnp.int32, x.shape, 1) + tile * tl
        x = jnp.where(lane < total_lanes, x, 0.0)

    s = x[:, 0:128]
    q = s * s
    for j in range(1, tl // 128):                         # static, unrolled
        c = x[:, j * 128:(j + 1) * 128]
        s = s + c
        q = q + c * c
    s_acc[...] += s
    q_acc[...] += q

    @pl.when(i == nt - 1)
    def _finalize():
        sa = s_acc[...]
        qa = q_acc[...]
        lane = lax.broadcasted_iota(jnp.int32, sa.shape, 1)
        evn = (lane % 2) == 0
        s_all = jnp.sum(sa, axis=1, keepdims=True)
        s_e = jnp.sum(jnp.where(evn, sa, 0.0), axis=1, keepdims=True)
        q_all = jnp.sum(qa, axis=1, keepdims=True)
        q_e = jnp.sum(jnp.where(evn, qa, 0.0), axis=1, keepdims=True)
        out_ref[...] = jnp.concatenate(
            [s_e, s_all - s_e, q_e, q_all - q_e], axis=1)[None]


def _channel_stats(x2, tl, split, cap):
    rows, lanes = x2.shape
    nt_total = _cdiv(lanes, tl)
    nt = nt_total // split
    ragged = (lanes % tl) != 0
    out = pl.pallas_call(
        partial(_stats_kernel, nt=nt, tl=tl, total_lanes=lanes, ragged=ragged),
        out_shape=jax.ShapeDtypeStruct((split, rows, 4), jnp.float32),
        grid=(split, nt),
        in_specs=[pl.BlockSpec((rows, tl), lambda p, i: (0, p * nt + i))],
        out_specs=pl.BlockSpec((1, rows, 4), lambda p, i: (p, 0, 0)),
        scratch_shapes=[pltpu.VMEM((rows, 128), jnp.float32),
                        pltpu.VMEM((rows, 128), jnp.float32)],
        compiler_params=_mosaic_params(cap, ("parallel", "arbitrary")),
    )(x2)
    return out.sum(axis=0)                                # (rows, 4) tiny combine


def _norm_kernel(x_ref, scale_ref, shift_ref, o_ref):
    x = x_ref[...]                                        # (rows, tl)
    scale = scale_ref[...]                                # (rows, 2)
    shift = shift_ref[...]
    lane = lax.broadcasted_iota(jnp.int32, x.shape, 1)
    evn = (lane % 2) == 0
    sc = jnp.where(evn, scale[:, 0:1], scale[:, 1:2])
    sh = jnp.where(evn, shift[:, 0:1], shift[:, 1:2])
    o_ref[...] = x * sc + sh


def _normalize(x2, scale2, shift2, tl, cap):
    rows, lanes = x2.shape
    nt = _cdiv(lanes, tl)
    return pl.pallas_call(
        _norm_kernel,
        out_shape=jax.ShapeDtypeStruct((rows, lanes), jnp.float32),
        grid=(nt,),
        in_specs=[pl.BlockSpec((rows, tl), lambda i: (0, i)),
                  pl.BlockSpec((rows, 2), lambda i: (0, 0)),
                  pl.BlockSpec((rows, 2), lambda i: (0, 0))],
        out_specs=pl.BlockSpec((rows, tl), lambda i: (0, i)),
        compiler_params=_mosaic_params(cap, ("parallel",)),
    )(x2, scale2, shift2)


# ----------------------------------------------------------------------------
# CBatchNorm2d forward
# ----------------------------------------------------------------------------
def cbatchnorm2d_forward(x, gamma_r, beta_r, gamma_i, beta_i, eps=BN_EPS,
                         force_two_pass=False, force_tile=None):
    """x: (B, C, H, W, 2) -> (B, C, H, W, 2); train-mode batch statistics."""
    B, C, H, W, cplx = x.shape
    assert cplx == 2, "expected trailing complex dim of size 2"
    rows = B * C
    lanes = H * W * 2
    n = float(B * H * W)

    # Zero-copy lane-dense view: row = (b, c); lanes interleave real/imag.
    x2 = x.reshape(rows, lanes).astype(jnp.float32)

    cap = _vmem_capacity_bytes()
    slab_bytes = rows * lanes * 4
    small_slab = slab_bytes * 12 <= cap * 3 // 4
    use_fused = (small_slab and not force_two_pass) or lanes < 128
    # TODO(synk): extremely tall-skinny inputs (H*W*2 < 128 with huge B*C) would
    # need row tiling in the streaming path; irrelevant for BatchNorm2d-sized data.

    if use_fused:
        gamma2 = jnp.tile(
            jnp.stack([gamma_r, gamma_i], axis=1).astype(jnp.float32), (B, 1))
        beta2 = jnp.tile(
            jnp.stack([beta_r, beta_i], axis=1).astype(jnp.float32), (B, 1))
        y2 = _fused_forward(x2, gamma2, beta2, num_ch=C, n=n, eps=eps, cap=cap)
    else:
        tl = int(force_tile) if force_tile else _pick_tile(rows, lanes, cap)
        assert tl % 128 == 0, "lane tile must be a multiple of 128"
        nt_total = _cdiv(lanes, tl)
        split = 2 if (nt_total >= 2 and nt_total % 2 == 0) else 1

        stats = _channel_stats(x2, tl, split, cap)        # (rows, 4)
        ch = stats.reshape(B, C, 4).sum(axis=0)           # (C, 4) tiny epilogue
        mean = ch[:, 0:2] / n
        var = jnp.maximum(ch[:, 2:4] / n - mean * mean, 0.0)
        g2 = jnp.stack([gamma_r, gamma_i], axis=1).astype(jnp.float32)   # (C, 2)
        b2 = jnp.stack([beta_r, beta_i], axis=1).astype(jnp.float32)
        scale = g2 * lax.rsqrt(var + eps)
        shift = b2 - mean * scale
        y2 = _normalize(x2, jnp.tile(scale, (B, 1)), jnp.tile(shift, (B, 1)),
                        tl, cap)

    # TODO(synk): running_mean / running_var EMA updates (momentum=0.1) are a
    # training-time buffer side effect that does not affect the returned tensor.
    return y2.reshape(B, C, H, W, 2)


# ----------------------------------------------------------------------------
# pure-JAX reference (two nn.BatchNorm2d in train mode)
# ----------------------------------------------------------------------------
def _ref_cbatchnorm2d(x, gamma_r, beta_r, gamma_i, beta_i, eps=BN_EPS):
    def bn(v, g, b):
        m = v.mean(axis=(0, 2, 3), keepdims=True)
        var = ((v - m) ** 2).mean(axis=(0, 2, 3), keepdims=True)
        return ((v - m) / jnp.sqrt(var + eps) * g[None, :, None, None]
                + b[None, :, None, None])

    return jnp.stack([bn(x[..., 0], gamma_r, beta_r),
                      bn(x[..., 1], gamma_i, beta_i)], axis=-1)


# ----------------------------------------------------------------------------
if __name__ == "__main__":
    key = jax.random.PRNGKey(0)
    k1, k2, k3, k4 = jax.random.split(key, 4)

    # Case 1: canonical small shape -> fused single-kernel path.
    B, C, H, W = 2, 4, 16, 16
    x = jax.random.normal(k1, (B, C, H, W, 2), jnp.float32)
    gamma_r = jnp.ones((C,), jnp.float32)
    beta_r = jnp.zeros((C,), jnp.float32)
    gamma_i = jnp.ones((C,), jnp.float32)
    beta_i = jnp.zeros((C,), jnp.float32)

    fwd = jax.jit(partial(cbatchnorm2d_forward, eps=BN_EPS))
    out = fwd(x, gamma_r, beta_r, gamma_i, beta_i)
    jax.block_until_ready(out)
    assert out.shape == (B, C, H, W, 2), out.shape
    assert bool(jnp.all(jnp.isfinite(out)))
    ref = _ref_cbatchnorm2d(x, gamma_r, beta_r, gamma_i, beta_i)
    err = float(jnp.max(jnp.abs(out - ref)))
    assert err < 1e-3, f"fused path max abs error vs reference: {err}"

    # Case 2: same input through the streaming two-pass path
    # (stats kernel with split reduction grid + normalize kernel).
    fwd2 = jax.jit(partial(cbatchnorm2d_forward, eps=BN_EPS,
                           force_two_pass=True, force_tile=128))
    out2 = fwd2(x, gamma_r, beta_r, gamma_i, beta_i)
    jax.block_until_ready(out2)
    err2 = float(jnp.max(jnp.abs(out2 - ref)))
    assert err2 < 1e-3, f"two-pass path max abs error vs reference: {err2}"

    # Case 3: non-trivial affine params, non-multiple-of-8 row count and a
    # ragged last lane tile (H*W*2 = 272 not a multiple of 128).
    B3, C3, H3, W3 = 2, 3, 8, 17
    x3 = jax.random.normal(k2, (B3, C3, H3, W3, 2), jnp.float32) * 1.7 + 0.4
    g3r = jax.random.normal(k3, (C3,), jnp.float32) * 0.5 + 1.0
    g3i = jax.random.normal(k4, (C3,), jnp.float32) * 0.5 + 1.0
    b3r = jnp.linspace(-0.3, 0.3, C3).astype(jnp.float32)
    b3i = jnp.linspace(0.2, -0.2, C3).astype(jnp.float32)
    fwd3 = jax.jit(partial(cbatchnorm2d_forward, eps=BN_EPS,
                           force_two_pass=True, force_tile=128))
    out3 = fwd3(x3, g3r, b3r, g3i, b3i)
    jax.block_until_ready(out3)
    ref3 = _ref_cbatchnorm2d(x3, g3r, b3r, g3i, b3i)
    err3 = float(jnp.max(jnp.abs(out3 - ref3)))
    assert err3 < 1e-3, f"ragged two-pass max abs error vs reference: {err3}"

    print("KERNEL_OK")
</pallas_src>

<mosaic_0001>
module attributes {stable_mosaic.version = 11 : i64} {
  func.func @_fused_kernel(%arg0: memref<8x512xf32, #tpu.memory_space<vmem>>, %arg1: memref<8x2xf32, #tpu.memory_space<vmem>>, %arg2: memref<8x2xf32, #tpu.memory_space<vmem>>, %arg3: memref<8x512xf32, #tpu.memory_space<vmem>>) attributes {dimension_semantics = [], scalar_prefetch = 0 : i64, scratch_operands = 0 : i64, tpu.core_type = #tpu.core_type<tc>} {
    %c0 = arith.constant 0 : index
    %c0_0 = arith.constant 0 : index
    %0 = vector.load %arg0[%c0, %c0_0] : memref<8x512xf32, #tpu.memory_space<vmem>>, vector<8x512xf32>
    %1 = tpu.iota {dimensions = array<i32: 1>} : vector<8x512xi32>
    %c2_i32 = arith.constant 2 : i32
    %c0_i32 = arith.constant 0 : i32
    %2 = arith.cmpi eq, %c2_i32, %c0_i32 : i32
    %c1_i32 = arith.constant 1 : i32
    %3 = arith.select %2, %c1_i32, %c2_i32 : i32
    %4 = vector.broadcast %3 : i32 to vector<8x512xi32>
    %5 = arith.remsi %1, %4 : vector<8x512xi32>
    %c0_i32_1 = arith.constant 0 : i32
    %6 = vector.broadcast %c0_i32_1 : i32 to vector<8x512xi32>
    %7 = arith.cmpi ne, %5, %6 : vector<8x512xi32>
    %c0_i32_2 = arith.constant 0 : i32
    %8 = vector.broadcast %c0_i32_2 : i32 to vector<8x512xi32>
    %9 = arith.cmpi slt, %5, %8 : vector<8x512xi32>
    %c0_i32_3 = arith.constant 0 : i32
    %10 = arith.cmpi slt, %3, %c0_i32_3 : i32
    %11 = vector.broadcast %10 : i1 to vector<8x512xi1>
    %12 = vector.broadcast %11 : vector<8x512xi1> to vector<8x512xi1>
    %13 = arith.xori %9, %12 : vector<8x512xi1>
    %14 = arith.andi %13, %7 : vector<8x512xi1>
    %15 = vector.broadcast %3 : i32 to vector<8x512xi32>
    %16 = arith.addi %5, %15 : vector<8x512xi32>
    %17 = arith.select %14, %16, %5 : vector<8x512xi1>, vector<8x512xi32>
    %c0_i32_4 = arith.constant 0 : i32
    %18 = vector.broadcast %c0_i32_4 : i32 to vector<8x512xi32>
    %19 = arith.cmpi eq, %17, %18 : vector<8x512xi32>
    %20 = arith.mulf %0, %0 : vector<8x512xf32>
    %cst = arith.constant dense<0.000000e+00> : vector<8xf32>
    %21 = vector.multi_reduction <add>, %0, %cst [1] : vector<8x512xf32> to vector<8xf32>
    %22 = vector.shape_cast %21 : vector<8xf32> to vector<8x1xf32>
    %cst_5 = arith.constant 0.000000e+00 : f32
    %23 = vector.broadcast %cst_5 : f32 to vector<8x512xf32>
    %24 = arith.select %19, %0, %23 : vector<8x512xi1>, vector<8x512xf32>
    %cst_6 = arith.constant dense<0.000000e+00> : vector<8xf32>
    %25 = vector.multi_reduction <add>, %24, %cst_6 [1] : vector<8x512xf32> to vector<8xf32>
    %26 = vector.shape_cast %25 : vector<8xf32> to vector<8x1xf32>
    %cst_7 = arith.constant dense<0.000000e+00> : vector<8xf32>
    %27 = vector.multi_reduction <add>, %20, %cst_7 [1] : vector<8x512xf32> to vector<8xf32>
    %28 = vector.shape_cast %27 : vector<8xf32> to vector<8x1xf32>
    %cst_8 = arith.constant 0.000000e+00 : f32
    %29 = vector.broadcast %cst_8 : f32 to vector<8x512xf32>
    %30 = arith.select %19, %20, %29 : vector<8x512xi1>, vector<8x512xf32>
    %cst_9 = arith.constant dense<0.000000e+00> : vector<8xf32>
    %31 = vector.multi_reduction <add>, %30, %cst_9 [1] : vector<8x512xf32> to vector<8xf32>
    %32 = vector.shape_cast %31 : vector<8xf32> to vector<8x1xf32>
    %33 = arith.subf %22, %26 : vector<8x1xf32>
    %34 = arith.subf %28, %32 : vector<8x1xf32>
    %35 = tpu.concatenate %26, %33, %32, %34 in 1 : vector<8x1xf32>, vector<8x1xf32>, vector<8x1xf32>, vector<8x1xf32> -> vector<8x4xf32>
    %36 = tpu.iota {dimensions = array<i32: 0>} : vector<8x8xi32>
    %c4_i32 = arith.constant 4 : i32
    %c0_i32_10 = arith.constant 0 : i32
    %37 = arith.cmpi eq, %c4_i32, %c0_i32_10 : i32
    %c1_i32_11 = arith.constant 1 : i32
    %38 = arith.select %37, %c1_i32_11, %c4_i32 : i32
    %39 = vector.broadcast %38 : i32 to vector<8x8xi32>
    %40 = arith.remsi %36, %39 : vector<8x8xi32>
    %c0_i32_12 = arith.constant 0 : i32
    %41 = vector.broadcast %c0_i32_12 : i32 to vector<8x8xi32>
    %42 = arith.cmpi ne, %40, %41 : vector<8x8xi32>
    %c0_i32_13 = arith.constant 0 : i32
    %43 = vector.broadcast %c0_i32_13 : i32 to vector<8x8xi32>
    %44 = arith.cmpi slt, %40, %43 : vector<8x8xi32>
    %c0_i32_14 = arith.constant 0 : i32
    %45 = arith.cmpi slt, %38, %c0_i32_14 : i32
    %46 = vector.broadcast %45 : i1 to vector<8x8xi1>
    %47 = vector.broadcast %46 : vector<8x8xi1> to vector<8x8xi1>
    %48 = arith.xori %44, %47 : vector<8x8xi1>
    %49 = arith.andi %48, %42 : vector<8x8xi1>
    %50 = vector.broadcast %38 : i32 to vector<8x8xi32>
    %51 = arith.addi %40, %50 : vector<8x8xi32>
    %52 = arith.select %49, %51, %40 : vector<8x8xi1>, vector<8x8xi32>
    %53 = tpu.iota {dimensions = array<i32: 1>} : vector<8x8xi32>
    %c4_i32_15 = arith.constant 4 : i32
    %c0_i32_16 = arith.constant 0 : i32
    %54 = arith.cmpi eq, %c4_i32_15, %c0_i32_16 : i32
    %c1_i32_17 = arith.constant 1 : i32
    %55 = arith.select %54, %c1_i32_17, %c4_i32_15 : i32
    %56 = vector.broadcast %55 : i32 to vector<8x8xi32>
    %57 = arith.remsi %53, %56 : vector<8x8xi32>
    %c0_i32_18 = arith.constant 0 : i32
    %58 = vector.broadcast %c0_i32_18 : i32 to vector<8x8xi32>
    %59 = arith.cmpi ne, %57, %58 : vector<8x8xi32>
    %c0_i32_19 = arith.constant 0 : i32
    %60 = vector.broadcast %c0_i32_19 : i32 to vector<8x8xi32>
    %61 = arith.cmpi slt, %57, %60 : vector<8x8xi32>
    %c0_i32_20 = arith.constant 0 : i32
    %62 = arith.cmpi slt, %55, %c0_i32_20 : i32
    %63 = vector.broadcast %62 : i1 to vector<8x8xi1>
    %64 = vector.broadcast %63 : vector<8x8xi1> to vector<8x8xi1>
    %65 = arith.xori %61, %64 : vector<8x8xi1>
    %66 = arith.andi %65, %59 : vector<8x8xi1>
    %67 = vector.broadcast %55 : i32 to vector<8x8xi32>
    %68 = arith.addi %57, %67 : vector<8x8xi32>
    %69 = arith.select %66, %68, %57 : vector<8x8xi1>, vector<8x8xi32>
    %70 = arith.cmpi eq, %52, %69 : vector<8x8xi32>
    %71 = arith.extui %70 : vector<8x8xi1> to vector<8x8xi32>
    %72 = arith.sitofp %71 : vector<8x8xi32> to vector<8x8xf32>
    %cst_21 = arith.constant dense<0.000000e+00> : vector<8x4xf32>
    %73 = tpu.matmul %72, %35, %cst_21 {dimension_numbers = #tpu.dot_dimension_numbers<[1], [0], [0], [1], [0, 0, 1, 1], [], []>} : vector<8x8xf32>, vector<8x4xf32>, vector<8x4xf32> -> vector<8x4xf32>
    %74 = vector.extract_strided_slice %73 {offsets = [0, 0], sizes = [8, 2], strides = [1, 1]} : vector<8x4xf32> to vector<8x2xf32>
    %cst_22 = arith.constant 0.001953125 : f32
    %75 = vector.broadcast %cst_22 : f32 to vector<8x2xf32>
    %76 = arith.mulf %74, %75 : vector<8x2xf32>
    %77 = vector.extract_strided_slice %73 {offsets = [0, 2], sizes = [8, 2], strides = [1, 1]} : vector<8x4xf32> to vector<8x2xf32>
    %cst_23 = arith.constant 0.001953125 : f32
    %78 = vector.broadcast %cst_23 : f32 to vector<8x2xf32>
    %79 = arith.mulf %77, %78 : vector<8x2xf32>
    %80 = arith.mulf %76, %76 : vector<8x2xf32>
    %81 = arith.subf %79, %80 : vector<8x2xf32>
    %cst_24 = arith.constant 0.000000e+00 : f32
    %82 = vector.broadcast %cst_24 : f32 to vector<8x2xf32>
    %83 = arith.maximumf %81, %82 : vector<8x2xf32>
    %c0_25 = arith.constant 0 : index
    %c0_26 = arith.constant 0 : index
    %84 = vector.load %arg1[%c0_25, %c0_26] : memref<8x2xf32, #tpu.memory_space<vmem>>, vector<8x2xf32>
    %cst_27 = arith.constant 9.99999974E-6 : f32
    %85 = vector.broadcast %cst_27 : f32 to vector<8x2xf32>
    %86 = arith.addf %83, %85 : vector<8x2xf32>
    %87 = math.rsqrt %86 : vector<8x2xf32>
    %88 = arith.mulf %84, %87 : vector<8x2xf32>
    %c0_28 = arith.constant 0 : index
    %c0_29 = arith.constant 0 : index
    %89 = vector.load %arg2[%c0_28, %c0_29] : memref<8x2xf32, #tpu.memory_space<vmem>>, vector<8x2xf32>
    %90 = arith.mulf %76, %88 : vector<8x2xf32>
    %91 = arith.subf %89, %90 : vector<8x2xf32>
    %92 = vector.extract_strided_slice %88 {offsets = [0, 0], sizes = [8, 1], strides = [1, 1]} : vector<8x2xf32> to vector<8x1xf32>
    %93 = vector.extract_strided_slice %88 {offsets = [0, 1], sizes = [8, 1], strides = [1, 1]} : vector<8x2xf32> to vector<8x1xf32>
    %94 = vector.shape_cast %92 : vector<8x1xf32> to vector<8x1xf32>
    %95 = vector.broadcast %94 : vector<8x1xf32> to vector<8x512xf32>
    %96 = vector.shape_cast %93 : vector<8x1xf32> to vector<8x1xf32>
    %97 = vector.broadcast %96 : vector<8x1xf32> to vector<8x512xf32>
    %98 = arith.select %19, %95, %97 : vector<8x512xi1>, vector<8x512xf32>
    %99 = vector.extract_strided_slice %91 {offsets = [0, 0], sizes = [8, 1], strides = [1, 1]} : vector<8x2xf32> to vector<8x1xf32>
    %100 = vector.extract_strided_slice %91 {offsets = [0, 1], sizes = [8, 1], strides = [1, 1]} : vector<8x2xf32> to vector<8x1xf32>
    %101 = vector.shape_cast %99 : vector<8x1xf32> to vector<8x1xf32>
    %102 = vector.broadcast %101 : vector<8x1xf32> to vector<8x512xf32>
    %103 = vector.shape_cast %100 : vector<8x1xf32> to vector<8x1xf32>
    %104 = vector.broadcast %103 : vector<8x1xf32> to vector<8x512xf32>
    %105 = arith.select %19, %102, %104 : vector<8x512xi1>, vector<8x512xf32>
    %106 = arith.mulf %0, %98 : vector<8x512xf32>
    %107 = arith.addf %106, %105 : vector<8x512xf32>
    %c0_30 = arith.constant 0 : index
    %c0_31 = arith.constant 0 : index
    %108 = vector.load %arg3[%c0_30, %c0_31] : memref<8x512xf32, #tpu.memory_space<vmem>>, vector<8x512xf32>
    tpu.vector_store %arg3[%c0_30, %c0_31], %107 {strides = array<i32>} : memref<8x512xf32, #tpu.memory_space<vmem>>, vector<8x512xf32>,
    return
  }
}

</mosaic_0001>

<llo_original>
// kernel: cbatchnorm2d_forward.1
$region0: #{cbatchnorm2d_forward.1}
  #allocation0 [shape = 'u32[]', space=smem, size = 0x4, offset = 0x4, fixed_abs, tag = 'smem constant byte address 0x4 - core index']
  #allocation1 [shape = 'u32[72,128]{1,0:T(1,128)}', space=vmem, size = 0x9000, scoped, tag = 'internal scratch']
  %s0 = inlined_call_operand.vmem [shape: f32[8,512], index: 0, kind: input, shape index: {}]
  %s1 = inlined_call_operand.vmem [shape: f32[8,2], index: 1, kind: input, shape index: {}]
  %s2 = inlined_call_operand.vmem [shape: f32[8,2], index: 2, kind: input, shape index: {}]
  %s3 = inlined_call_operand.vmem [shape: f32[8,512], index: 3, kind: output, shape index: {}]
  %s4 = sld [smem:[#allocation0]]
  $region22: #{cbatchnorm2d_forward.1} parent=0
    _
  %s6 = ssub.s32 1, %s4
  %s7 = scalar_select 0, %s6, %s4
  // Predicated region
  $region2: #{cbatchnorm2d_forward.1} parent=0 // pred_check
    _
  $region3: #{cbatchnorm2d_forward.1} parent=0 // pred_check_branch
    %9 = sbr.rel (0) target = $region5
  $region4: #{cbatchnorm2d_forward.1} parent=0 // pred_region
    _
  $region5: #{cbatchnorm2d_forward.1} parent=0 // pred_fallthru
    _
  // Predicated region
  $region6: #{cbatchnorm2d_forward.1} parent=0 // pred_check
    _
  $region7: #{cbatchnorm2d_forward.1} parent=0 // pred_check_branch
    %11 = sbr.rel (0) target = $region9
  $region8: #{cbatchnorm2d_forward.1} parent=0 // pred_region
    _
  $region9: #{cbatchnorm2d_forward.1} parent=0 // pred_fallthru
    _
  // Predicated region
  $region10: #{cbatchnorm2d_forward.1} parent=0 // pred_check
    _
  $region11: #{cbatchnorm2d_forward.1} parent=0 // pred_check_branch
    %13 = sbr.rel (0) target = $region13
  $region12: #{cbatchnorm2d_forward.1} parent=0 // pred_region
    _
  $region13: #{cbatchnorm2d_forward.1} parent=0 // pred_fallthru
    _
  %v14 = vld [vmem:[%s0] sm:$0xff]
  %v15 = vld [vmem:[%s0 + $0x8] sm:$0xff]
  %v16 = vld [vmem:[%s0 + $0x10] sm:$0xff]
  %v17 = vld [vmem:[%s0 + $0x18] sm:$0xff]
  %v18 = vlaneseq
  %v19 = vand.u32 %v18, 127
  %v20 = vadd.s32 %v19, 128
  %v21 = vadd.s32 %v19, 256
  %v22 = vadd.s32 %v19, 384
  %vm23 = vcmp.lt.s32.totalorder %v19, 0
  %v24 = vsub.s32 0, %v19
  %v25 = vsel %vm23, %v24, %v19
  %v26 = vshrl.u32 %v25, 1
  %v27 = vand.u32 %v25, 1
  %v28 = vsub.s32 0, %v27
  %v29 = vsel %vm23, %v28, %v27
  %vm30 = vcmp.lt.s32.totalorder %v20, 0
  %v31 = vsub.s32 0, %v20
  %v32 = vsel %vm30, %v31, %v20
  %v33 = vshrl.u32 %v32, 1
  %v34 = vand.u32 %v32, 1
  %v35 = vsub.s32 0, %v34
  %v36 = vsel %vm30, %v35, %v34
  %vm37 = vcmp.lt.s32.totalorder %v21, 0
  %v38 = vsub.s32 0, %v21
  %v39 = vsel %vm37, %v38, %v21
  %v40 = vshrl.u32 %v39, 1
  %v41 = vand.u32 %v39, 1
  %v42 = vsub.s32 0, %v41
  %v43 = vsel %vm37, %v42, %v41
  %vm44 = vcmp.lt.s32.totalorder %v22, 0
  %v45 = vsub.s32 0, %v22
  %v46 = vsel %vm44, %v45, %v22
  %v47 = vshrl.u32 %v46, 1
  %v48 = vand.u32 %v46, 1
  %v49 = vsub.s32 0, %v48
  %v50 = vsel %vm44, %v49, %v48
  %vm51 = vcmp.ne.s32.totalorder %v29, 0
  %vm52 = vcmp.ne.s32.totalorder %v36, 0
  %vm53 = vcmp.ne.s32.totalorder %v43, 0
  %vm54 = vcmp.ne.s32.totalorder %v50, 0
  %vm55 = vcmp.lt.s32.totalorder %v29, 0
  %vm56 = vcmp.lt.s32.totalorder %v36, 0
  %vm57 = vcmp.lt.s32.totalorder %v43, 0
  %vm58 = vcmp.lt.s32.totalorder %v50, 0
  %vm59 = vmand %vm55, %vm51
  %vm60 = vmand %vm56, %vm52
  %vm61 = vmand %vm57, %vm53
  %vm62 = vmand %vm58, %vm54
  %v63 = vadd.s32 %v29, 2
  %v64 = vadd.s32 %v36, 2
  %v65 = vadd.s32 %v43, 2
  %v66 = vadd.s32 %v50, 2
  %v67 = vsel %vm59, %v63, %v29
  %v68 = vsel %vm60, %v64, %v36
  %v69 = vsel %vm61, %v65, %v43
  %v70 = vsel %vm62, %v66, %v50
  %vm71 = vcmp.eq.s32.totalorder %v67, 0
  %vm72 = vcmp.eq.s32.totalorder %v68, 0
  %vm73 = vcmp.eq.s32.totalorder %v69, 0
  %vm74 = vcmp.eq.s32.totalorder %v70, 0
  %v75 = vmul.f32 %v14, %v14
  %v76 = vmul.f32 %v15, %v15
  %v77 = vmul.f32 %v16, %v16
  %v78 = vmul.f32 %v17, %v17
  %v79 = vadd.f32 %v14, %v15
  %v80 = vadd.f32 %v79, %v16
  %v81 = vadd.f32 %v80, %v17
  %82 = vadd.xlane.f32.xlu0 %v81
  %v83 = vpop.xlane.xlu0 %82
  %v84 = vsel %vm71, %v14, 0.0
  %v85 = vsel %vm72, %v15, 0.0
  %v86 = vsel %vm73, %v16, 0.0
  %v87 = vsel %vm74, %v17, 0.0
  %v88 = vadd.f32 %v84, %v85
  %v89 = vadd.f32 %v88, %v86
  %v90 = vadd.f32 %v89, %v87
  %91 = vadd.xlane.f32.xlu0 %v90
  %v92 = vpop.xlane.xlu0 %91
  %v93 = vadd.f32 %v75, %v76
  %v94 = vadd.f32 %v93, %v77
  %v95 = vadd.f32 %v94, %v78
  %96 = vadd.xlane.f32.xlu0 %v95
  %v97 = vpop.xlane.xlu0 %96
  %v98 = vsel %vm71, %v75, 0.0
  %v99 = vsel %vm72, %v76, 0.0
  %v100 = vsel %vm73, %v77, 0.0
  %v101 = vsel %vm74, %v78, 0.0
  %v102 = vadd.f32 %v98, %v99
  %v103 = vadd.f32 %v102, %v100
  %v104 = vadd.f32 %v103, %v101
  %105 = vadd.xlane.f32.xlu0 %v104
  %v106 = vpop.xlane.xlu0 %105
  %v107 = vsub.f32 %v83, %v92
  %v108 = vsub.f32 %v97, %v106
  %vm109 = vcmask 7168
  %v110 = vsel %vm109, %v92, %v107
  %vm111 = vcmask 15360
  %v112 = vsel %vm111, %v110, %v106
  %vm113 = vcmask 23552
  %v114 = vsel %vm113, %v112, %v108
  %v115 = vlaneseq
  %v116 = vshrl.u32 %v115, 7
  %vm117 = vcmp.lt.s32.totalorder %v116, 0
  %v118 = vsub.s32 0, %v116
  %v119 = vsel %vm117, %v118, %v116
  %v120 = vshrl.u32 %v119, 2
  %v121 = vand.u32 %v119, 3
  %v122 = vsub.s32 0, %v121
  %v123 = vsel %vm117, %v122, %v121
  %vm124 = vcmp.ne.s32.totalorder %v123, 0
  %vm125 = vcmp.lt.s32.totalorder %v123, 0
  %vm126 = vmand %vm125, %vm124
  %v127 = vadd.s32 %v123, 4
  %v128 = vsel %vm126, %v127, %v123
  %vm129 = vcmp.lt.s32.totalorder %v19, 0
  %v130 = vsub.s32 0, %v19
  %v131 = vsel %vm129, %v130, %v19
  %v132 = vshrl.u32 %v131, 2
  %v133 = vand.u32 %v131, 3
  %v134 = vsub.s32 0, %v133
  %v135 = vsel %vm129, %v134, %v133
  %vm136 = vcmp.ne.s32.totalorder %v135, 0
  %vm137 = vcmp.lt.s32.totalorder %v135, 0
  %vm138 = vmand %vm137, %vm136
  %v139 = vadd.s32 %v135, 4
  %v140 = vsel %vm138, %v139, %v135
  %vm141 = vcmp.eq.s32.totalorder %v128, %v140
  %v142 = vsel %vm141, 1, 0
  %v143 = vcvt.s32.f32 %v142
  %vm144 = vcmask 64512
  %v146 = vsel %vm144, %v143, 0
  %148 = vmatpush.msra.mxu0 0.0
  %149 = vmatpush.msra.mxu0 0.0
  %150 = vmatpush.msra.mxu0 0.0
  %151 = vmatpush.msra.mxu0 0.0
  %152 = vmatpush.msra.mxu0 0.0
  %153 = vmatpush.msra.mxu0 0.0
  %154 = vmatpush.msra.mxu0 0.0
  %155 = vmatpush.msra.mxu0 0.0
  %156 = vmatpush.msra.mxu0 0.0
  %157 = vmatpush.msra.mxu0 0.0
  %158 = vmatpush.msra.mxu0 0.0
  %159 = vmatpush.msra.mxu0 0.0
  %160 = vmatpush.msra.mxu0 0.0
  %161 = vmatpush.msra.mxu0 0.0
  %162 = vmatpush.msra.mxu0 0.0
  %163 = vmatpush.msra.mxu0 %v114
  %164 = vmatmul.f32.gmra.mxu0 %v146
  %v165 = vpop.f32.mrf.mxu0
  %v166 = vadd.f32 0.0, %v165
  %167 = vdwg.mxu0
  %v168 = vmul.f32 %v166, 0.001953125
  %v169 = vmul.f32 %v168, %v168
  %171 = vrot.lane.b32.xlu0 %v169, 2
  %v172 = vpop.permute.xlu0 %171
  %v174 = vsub.f32 %v168, %v172
  %v175 = vmax.f32 %v174, 0.0
  %v176 = vld [vmem:[%s1] sm:$0xff]
  %v177 = vadd.f32 %v175, 1e-05
  %v178 = vrsqrt.pop %v177
  %v179 = vmul.f32 %v178, %v177
  %v180 = vmul.f32 %v179, %v178
  %v181 = vmul.f32 0.5, %v180
  %v182 = vsub.f32 1.5, %v181
  %v183 = vmul.f32 %v178, %v182
  %vm184 = vweird.f32 %v177
  %vm185 = vweird.f32 %v178
  %vm186 = vmor %vm184, %vm185
  %v187 = vsel %vm186, %v178, %v183
  %189 = vrot.lane.b32.xlu0 %v187, 126
  %v190 = vpop.permute.xlu0 %189
  %v192 = vmul.f32 %v176, %v190
  %v193 = vld [vmem:[%s2] sm:$0xff]
  %v194 = vmul.f32 %v168, %v192
  %v195 = vsub.f32 %v193, %v194
  %197 = vset.pattern.permute.xlu0 0
  %198 = vperm.xlu0 %197, %v192
  %v199 = vpop.permute.xlu0 %198
  %201 = vset.pattern.permute.xlu0 1
  %202 = vperm.xlu0 %201, %v192
  %v203 = vpop.permute.xlu0 %202
  %v205 = vsel %vm71, %v199, %v203
  %v206 = vsel %vm72, %v199, %v203
  %v207 = vsel %vm73, %v199, %v203
  %v208 = vsel %vm74, %v199, %v203
  %210 = vset.pattern.permute.xlu0 0
  %211 = vperm.xlu0 %210, %v195
  %v212 = vpop.permute.xlu0 %211
  %214 = vset.pattern.permute.xlu0 1
  %215 = vperm.xlu0 %214, %v195
  %v216 = vpop.permute.xlu0 %215
  %v218 = vsel %vm71, %v212, %v216
  %v219 = vsel %vm72, %v212, %v216
  %v220 = vsel %vm73, %v212, %v216
  %v221 = vsel %vm74, %v212, %v216
  %v222 = vmul.f32 %v14, %v205
  %v223 = vmul.f32 %v15, %v206
  %v224 = vmul.f32 %v16, %v207
  %v225 = vmul.f32 %v17, %v208
  %v226 = vadd.f32 %v222, %v218
  %v227 = vadd.f32 %v223, %v219
  %v228 = vadd.f32 %v224, %v220
  %v229 = vadd.f32 %v225, %v221
  %230 = vst [vmem:[%s3] sm:$0xff] %v226
  %231 = vst [vmem:[%s3 + $0x8] sm:$0xff] %v227
  %232 = vst [vmem:[%s3 + $0x10] sm:$0xff] %v228
  %233 = vst [vmem:[%s3 + $0x18] sm:$0xff] %v229
  // Predicated region
  $region14: #{cbatchnorm2d_forward.1} parent=0 // pred_check
    _
  $region15: #{cbatchnorm2d_forward.1} parent=0 // pred_check_branch
    %235 = sbr.rel (0) target = $region17
  $region16: #{cbatchnorm2d_forward.1} parent=0 // pred_region
    _
  $region17: #{cbatchnorm2d_forward.1} parent=0 // pred_fallthru
    _
  // Predicated region
  $region18: #{cbatchnorm2d_forward.1} parent=0 // pred_check
    _
  $region19: #{cbatchnorm2d_forward.1} parent=0 // pred_check_branch
    %237 = sbr.rel (0) target = $region21
  $region20: #{cbatchnorm2d_forward.1} parent=0 // pred_region
    _
  $region21: #{cbatchnorm2d_forward.1} parent=0 // pred_fallthru
    _

</llo_original>
